<compile_context>
chip_gen: v5e
topology: v5e:2x2
jax: 0.10.0
libtpu: 0.0.40
codegen_flags: <defaults>
</compile_context>

<pallas_src>
import jax
import jax.numpy as jnp
from jax import lax
from jax.experimental import pallas as pl
from jax.experimental.pallas import tpu as pltpu

EPS = 1e-5  # nn.InstanceNorm2d default (affine=False, biased variance)


def conv_in_relu_kernel(w_ref, p_ref, o_ref):
    # w_ref: (Cout, K)      bf16  reshaped conv weight (resident across grid)
    # p_ref: (Nt, K, HW)    bf16  im2col patches of Nt images (K on sublanes)
    # o_ref: (Nt, Cout, HW) f32   outputs (HW lane-dense)
    w = w_ref[...]
    nt = p_ref.shape[0]
    hw = o_ref.shape[-1]
    inv_hw = 1.0 / hw  # static; true Ho*Wo (no HW padding at these sizes)

    def body(i, carry):
        # Conv as one MXU matmul with f32 accumulation.
        y = jnp.dot(w, p_ref[i], preferred_element_type=jnp.float32)   # (Cout, HW)
        # One-pass InstanceNorm stats (f32, clamped variance).
        s1 = jnp.sum(y, axis=1, keepdims=True)                          # (Cout, 1)
        s2 = jnp.sum(y * y, axis=1, keepdims=True)                      # (Cout, 1)
        mean = s1 * inv_hw
        var = jnp.maximum(s2 * inv_hw - mean * mean, 0.0)
        inv_std = lax.rsqrt(var + EPS)                                   # EUP slot
        # Normalize + ReLU, single fused store per image (lane-dense).
        o_ref[i] = jnp.maximum(y * inv_std - mean * inv_std, 0.0).astype(o_ref.dtype)
        return carry

    lax.fori_loop(0, nt, body, 0, unroll=True)


def _im2col_k_hw(x, k, stride, padding, reflection=False):
    """x: (N, Cin, H, W) -> patches (N, Cin*k*k, Ho*Wo).

    K-axis ordering (Cin-major, then kh, kw) matches weight.reshape(Cout, K).
    HW-axis ordering is (Ho, Wo) row-major, i.e. NCHW spatial order.
    Runs in the input dtype (call with bf16 to halve the 9x blow-up traffic).
    """
    N, Cin, H, W = x.shape
    Ho = (H + 2 * padding - k) // stride + 1
    Wo = (W + 2 * padding - k) // stride + 1
    mode = "reflect" if reflection else "constant"
    xp = jnp.pad(x, ((0, 0), (0, 0), (padding, padding), (padding, padding)),
                 mode=mode)
    cols = []
    for i in range(k):
        for j in range(k):
            cols.append(xp[:, :, i:i + stride * (Ho - 1) + 1:stride,
                              j:j + stride * (Wo - 1) + 1:stride])  # (N,Cin,Ho,Wo)
    patches = jnp.stack(cols, axis=2)                 # (N, Cin, k*k, Ho, Wo)
    patches = patches.reshape(N, Cin * k * k, Ho * Wo)
    return patches, Ho, Wo


def conv_in_relu(x_nchw, weight, *, stride, padding, reflection=False,
                 images_per_step=8):
    """
    x_nchw: (N, Cin, H, W) float32
    weight: (Cout, Cin, k, k) float32 (PyTorch Conv2d layout, bias=False)
    returns (N, Cout, Ho, Wo) float32
    """
    N, Cin, H, W = x_nchw.shape
    Cout, _, k, _ = weight.shape

    # bf16 BEFORE im2col: the 9x patch materialization runs in half the bytes.
    x_bf16 = x_nchw.astype(jnp.bfloat16)
    patches, Ho, Wo = _im2col_k_hw(x_bf16, k, stride, padding, reflection)
    HW, K = Ho * Wo, Cin * k * k

    # Batch Nt images per grid step; pad N up to a multiple of Nt (padded
    # images are all-zero -> harmless, sliced off below).
    Nt = min(N, images_per_step)
    grid_n = (N + Nt - 1) // Nt
    Npad = grid_n * Nt
    if Npad != N:
        patches = jnp.pad(patches, ((0, Npad - N), (0, 0), (0, 0)))

    w_mat = weight.reshape(Cout, K).astype(jnp.bfloat16)         # (Cout, K)

    out = pl.pallas_call(
        conv_in_relu_kernel,
        out_shape=jax.ShapeDtypeStruct((Npad, Cout, HW), jnp.float32),
        grid_spec=pltpu.PrefetchScalarGridSpec(
            num_scalar_prefetch=0,
            grid=(grid_n,),                              # parallel over batch tiles
            in_specs=[
                pl.BlockSpec((Cout, K), lambda n: (0, 0)),       # weight resident
                pl.BlockSpec((Nt, K, HW), lambda n: (n, 0, 0)),
            ],
            out_specs=pl.BlockSpec((Nt, Cout, HW), lambda n: (n, 0, 0)),
        ),
        compiler_params=pltpu.CompilerParams(
            dimension_semantics=("parallel",)),
    )(w_mat, patches)

    # Output is already (N, Cout, Ho*Wo): pure reshape, no transpose pass.
    return out[:N].reshape(N, Cout, Ho, Wo)


def _reference(x_nchw, weight, *, stride, padding):
    # plain-JAX reference: conv -> instance norm -> relu (all f32)
    y = lax.conv_general_dilated(
        x_nchw, weight, window_strides=(stride, stride),
        padding=[(padding, padding), (padding, padding)],
        dimension_numbers=("NCHW", "OIHW", "NCHW"))
    mean = jnp.mean(y, axis=(2, 3), keepdims=True)
    var = jnp.mean((y - mean) ** 2, axis=(2, 3), keepdims=True)
    return jnp.maximum((y - mean) * lax.rsqrt(var + EPS), 0.0)


if __name__ == "__main__":
    key = jax.random.PRNGKey(0)
    kx, kw = jax.random.split(key)

    # ConvINReLU(in_channels=4, out_channels=8, kernel_size=3, padding=1, stride=1)
    N, Cin, H, W = 2, 4, 16, 16
    Cout, ksize, padding, stride = 8, 3, 1, 1

    x = jax.random.normal(kx, (N, Cin, H, W), dtype=jnp.float32)
    # deterministic synthetic weight (PyTorch layout: Cout, Cin, kh, kw), bias=False
    weight = jax.random.normal(kw, (Cout, Cin, ksize, ksize), dtype=jnp.float32) * 0.1

    out = conv_in_relu(x, weight, stride=stride, padding=padding)
    out = jax.block_until_ready(out)
    assert out.shape == (N, Cout, H, W)

    # Tight check of kernel math: reference fed the same bf16-rounded operands.
    ref_bf16_inputs = _reference(
        x.astype(jnp.bfloat16).astype(jnp.float32),
        weight.astype(jnp.bfloat16).astype(jnp.float32),
        stride=stride, padding=padding)
    assert jnp.allclose(out, ref_bf16_inputs, atol=1e-3, rtol=1e-3)

    # Looser check against the full-f32 reference (bf16 operand quantization).
    ref = _reference(x, weight, stride=stride, padding=padding)
    assert jnp.allclose(out, ref, atol=5e-2, rtol=5e-2)

    print("KERNEL_OK")
</pallas_src>

<mosaic_0001>
module attributes {stable_mosaic.version = 11 : i64} {
  func.func @conv_in_relu_kernel(%arg0: i32, %arg1: memref<8x36xbf16, #tpu.memory_space<vmem>>, %arg2: memref<2x36x256xbf16, #tpu.memory_space<vmem>>, %arg3: memref<2x8x256xf32, #tpu.memory_space<vmem>>) attributes {dimension_semantics = [#tpu.dimension_semantics<parallel>], iteration_bounds = array<i64: 1>, scalar_prefetch = 0 : i64, scratch_operands = 0 : i64, tpu.core_type = #tpu.core_type<tc>, window_params = [{pipeline_mode = #tpu.pipeline_mode<synchronous>, transform_indices = @transform_0, window_bounds = array<i64: 8, 36>}, {transform_indices = @transform_1, window_bounds = array<i64: 2, 36, 256>}, {transform_indices = @transform_2, window_bounds = array<i64: 2, 8, 256>}]} {
    %c0 = arith.constant 0 : index
    %c0_0 = arith.constant 0 : index
    %0 = vector.load %arg1[%c0, %c0_0] : memref<8x36xbf16, #tpu.memory_space<vmem>>, vector<8x36xbf16>
    %c0_i32 = arith.constant 0 : i32
    %1 = arith.index_cast %c0_i32 : i32 to index
    %c0_1 = arith.constant 0 : index
    %c0_2 = arith.constant 0 : index
    %2 = vector.load %arg2[%1, %c0_1, %c0_2] : memref<2x36x256xbf16, #tpu.memory_space<vmem>>, vector<1x36x256xbf16>
    %3 = vector.shape_cast %2 : vector<1x36x256xbf16> to vector<36x256xbf16>
    %cst = arith.constant dense<0.000000e+00> : vector<8x256xf32>
    %4 = tpu.matmul %0, %3, %cst {dimension_numbers = #tpu.dot_dimension_numbers<[1], [0], [0], [1], [0, 0, 1, 1], [], []>} : vector<8x36xbf16>, vector<36x256xbf16>, vector<8x256xf32> -> vector<8x256xf32>
    %cst_3 = arith.constant dense<0.000000e+00> : vector<8xf32>
    %5 = vector.multi_reduction <add>, %4, %cst_3 [1] : vector<8x256xf32> to vector<8xf32>
    %6 = vector.shape_cast %5 : vector<8xf32> to vector<8x1xf32>
    %7 = arith.mulf %4, %4 : vector<8x256xf32>
    %cst_4 = arith.constant dense<0.000000e+00> : vector<8xf32>
    %8 = vector.multi_reduction <add>, %7, %cst_4 [1] : vector<8x256xf32> to vector<8xf32>
    %9 = vector.shape_cast %8 : vector<8xf32> to vector<8x1xf32>
    %cst_5 = arith.constant 3.906250e-03 : f32
    %10 = vector.broadcast %cst_5 : f32 to vector<8x1xf32>
    %11 = arith.mulf %6, %10 : vector<8x1xf32>
    %cst_6 = arith.constant 3.906250e-03 : f32
    %12 = vector.broadcast %cst_6 : f32 to vector<8x1xf32>
    %13 = arith.mulf %9, %12 : vector<8x1xf32>
    %14 = arith.mulf %11, %11 : vector<8x1xf32>
    %15 = arith.subf %13, %14 : vector<8x1xf32>
    %cst_7 = arith.constant 0.000000e+00 : f32
    %16 = vector.broadcast %cst_7 : f32 to vector<8x1xf32>
    %17 = arith.maximumf %15, %16 : vector<8x1xf32>
    %cst_8 = arith.constant 9.99999974E-6 : f32
    %18 = vector.broadcast %cst_8 : f32 to vector<8x1xf32>
    %19 = arith.addf %17, %18 : vector<8x1xf32>
    %20 = math.rsqrt %19 : vector<8x1xf32>
    %21 = vector.broadcast %20 : vector<8x1xf32> to vector<8x256xf32>
    %22 = arith.mulf %4, %21 : vector<8x256xf32>
    %23 = arith.mulf %11, %20 : vector<8x1xf32>
    %24 = vector.broadcast %23 : vector<8x1xf32> to vector<8x256xf32>
    %25 = arith.subf %22, %24 : vector<8x256xf32>
    %cst_9 = arith.constant 0.000000e+00 : f32
    %26 = vector.broadcast %cst_9 : f32 to vector<8x256xf32>
    %27 = arith.maximumf %25, %26 : vector<8x256xf32>
    %28 = arith.index_cast %c0_i32 : i32 to index
    %c0_10 = arith.constant 0 : index
    %c0_11 = arith.constant 0 : index
    %29 = vector.load %arg3[%28, %c0_10, %c0_11] : memref<2x8x256xf32, #tpu.memory_space<vmem>>, vector<1x8x256xf32>
    %30 = vector.shape_cast %29 : vector<1x8x256xf32> to vector<8x256xf32>
    %31 = vector.shape_cast %27 : vector<8x256xf32> to vector<1x8x256xf32>
    tpu.vector_store %arg3[%28, %c0_10, %c0_11], %31 {strides = array<i32>} : memref<2x8x256xf32, #tpu.memory_space<vmem>>, vector<1x8x256xf32>,
    %c1_i32 = arith.constant 1 : i32
    %32 = arith.index_cast %c1_i32 : i32 to index
    %c0_12 = arith.constant 0 : index
    %c0_13 = arith.constant 0 : index
    %33 = vector.load %arg2[%32, %c0_12, %c0_13] : memref<2x36x256xbf16, #tpu.memory_space<vmem>>, vector<1x36x256xbf16>
    %34 = vector.shape_cast %33 : vector<1x36x256xbf16> to vector<36x256xbf16>
    %cst_14 = arith.constant dense<0.000000e+00> : vector<8x256xf32>
    %35 = tpu.matmul %0, %34, %cst_14 {dimension_numbers = #tpu.dot_dimension_numbers<[1], [0], [0], [1], [0, 0, 1, 1], [], []>} : vector<8x36xbf16>, vector<36x256xbf16>, vector<8x256xf32> -> vector<8x256xf32>
    %cst_15 = arith.constant dense<0.000000e+00> : vector<8xf32>
    %36 = vector.multi_reduction <add>, %35, %cst_15 [1] : vector<8x256xf32> to vector<8xf32>
    %37 = vector.shape_cast %36 : vector<8xf32> to vector<8x1xf32>
    %38 = arith.mulf %35, %35 : vector<8x256xf32>
    %cst_16 = arith.constant dense<0.000000e+00> : vector<8xf32>
    %39 = vector.multi_reduction <add>, %38, %cst_16 [1] : vector<8x256xf32> to vector<8xf32>
    %40 = vector.shape_cast %39 : vector<8xf32> to vector<8x1xf32>
    %cst_17 = arith.constant 3.906250e-03 : f32
    %41 = vector.broadcast %cst_17 : f32 to vector<8x1xf32>
    %42 = arith.mulf %37, %41 : vector<8x1xf32>
    %cst_18 = arith.constant 3.906250e-03 : f32
    %43 = vector.broadcast %cst_18 : f32 to vector<8x1xf32>
    %44 = arith.mulf %40, %43 : vector<8x1xf32>
    %45 = arith.mulf %42, %42 : vector<8x1xf32>
    %46 = arith.subf %44, %45 : vector<8x1xf32>
    %cst_19 = arith.constant 0.000000e+00 : f32
    %47 = vector.broadcast %cst_19 : f32 to vector<8x1xf32>
    %48 = arith.maximumf %46, %47 : vector<8x1xf32>
    %cst_20 = arith.constant 9.99999974E-6 : f32
    %49 = vector.broadcast %cst_20 : f32 to vector<8x1xf32>
    %50 = arith.addf %48, %49 : vector<8x1xf32>
    %51 = math.rsqrt %50 : vector<8x1xf32>
    %52 = vector.broadcast %51 : vector<8x1xf32> to vector<8x256xf32>
    %53 = arith.mulf %35, %52 : vector<8x256xf32>
    %54 = arith.mulf %42, %51 : vector<8x1xf32>
    %55 = vector.broadcast %54 : vector<8x1xf32> to vector<8x256xf32>
    %56 = arith.subf %53, %55 : vector<8x256xf32>
    %cst_21 = arith.constant 0.000000e+00 : f32
    %57 = vector.broadcast %cst_21 : f32 to vector<8x256xf32>
    %58 = arith.maximumf %56, %57 : vector<8x256xf32>
    %59 = arith.index_cast %c1_i32 : i32 to index
    %c0_22 = arith.constant 0 : index
    %c0_23 = arith.constant 0 : index
    %60 = vector.load %arg3[%59, %c0_22, %c0_23] : memref<2x8x256xf32, #tpu.memory_space<vmem>>, vector<1x8x256xf32>
    %61 = vector.shape_cast %60 : vector<1x8x256xf32> to vector<8x256xf32>
    %62 = vector.shape_cast %58 : vector<8x256xf32> to vector<1x8x256xf32>
    tpu.vector_store %arg3[%59, %c0_22, %c0_23], %62 {strides = array<i32>} : memref<2x8x256xf32, #tpu.memory_space<vmem>>, vector<1x8x256xf32>,
    %c2_i32 = arith.constant 2 : i32
    return
  }
  func.func @transform_0(%arg0: i32) -> (i32, i32) {
    %c0_i32 = arith.constant 0 : i32
    %c0_i32_0 = arith.constant 0 : i32
    %c0_i32_1 = arith.constant 0 : i32
    return %c0_i32, %c0_i32_0 : i32, i32
  }
  func.func @transform_1(%arg0: i32) -> (i32, i32, i32) {
    %c0_i32 = arith.constant 0 : i32
    %c0_i32_0 = arith.constant 0 : i32
    %c0_i32_1 = arith.constant 0 : i32
    return %arg0, %c0_i32, %c0_i32_0 : i32, i32, i32
  }
  func.func @transform_2(%arg0: i32) -> (i32, i32, i32) {
    %c0_i32 = arith.constant 0 : i32
    %c0_i32_0 = arith.constant 0 : i32
    %c0_i32_1 = arith.constant 0 : i32
    return %arg0, %c0_i32, %c0_i32_0 : i32, i32, i32
  }
}

</mosaic_0001>

<llo_original>
// kernel: tpu_custom_call.1
$region0: #{tpu_custom_call.1}
  #allocation0 [shape = 'u32[]', space=smem, size = 0x4, offset = 0x4, fixed_abs, tag = 'smem constant byte address 0x4 - core index']
  #allocation1 [shape = 'u32[72,128]{1,0:T(1,128)}', space=vmem, size = 0x9000, scoped, tag = 'internal scratch']
  %s0 = inlined_call_operand.vmem [shape: bf16[8,36], index: 0, kind: input, shape index: {}]
  %s1 = inlined_call_operand.vmem [shape: bf16[2,36,256], index: 1, kind: input, shape index: {}]
  %s2 = inlined_call_operand.hbm [shape: f32[2,8,256], index: 2, kind: output, shape index: {}]
  %s3 = sld [smem:[#allocation0]]
  $region18: #{tpu_custom_call.1} parent=0
    _
  %s5 = ssub.s32 1, %s3
  %s6 = scalar_select 0, %s5, %s3
  $region1: #{tpu_custom_call.1} parent=0
    #allocation2 [shape = 'u8[16384]{0}', space=vmem, size = 0x4000, scoped, tag = 'output window, operand 0, single buffered']
    #allocation3 [shape = 's32[1]{0}', space=sflag, size = 0x4, scoped, tag = 'scoped memory for tpu_custom_call.1']
    %7 = vsyncpa [#allocation3], 0
    // Predicated region
    $region2: #{tpu_custom_call.1} parent=1 // pred_check
      _
    $region3: #{tpu_custom_call.1} parent=1 // pred_check_branch
      %9 = sbr.rel (0) target = $region5
    $region4: #{tpu_custom_call.1} parent=1 // pred_region
      _
    $region5: #{tpu_custom_call.1} parent=1 // pred_fallthru
      _
    // Predicated region
    $region6: #{tpu_custom_call.1} parent=1 // pred_check
      _
    $region7: #{tpu_custom_call.1} parent=1 // pred_check_branch
      %11 = sbr.rel (0) target = $region9
    $region8: #{tpu_custom_call.1} parent=1 // pred_region
      _
    $region9: #{tpu_custom_call.1} parent=1 // pred_fallthru
      _
    %v13 = vld [vmem:[%s0] sm:$0xf]
    %v14 = vld [vmem:[%s1] sm:$0xff]
    %v15 = vld [vmem:[%s1 + $0x8] sm:$0xff]
    %v16 = vld [vmem:[%s1 + $0x10] sm:$0xff]
    %v17 = vld [vmem:[%s1 + $0x18] sm:$0xff]
    %v18 = vld [vmem:[%s1 + $0x20] sm:$0x33]
    %v24 = vunpack.c.l.b16 %v14
    %v25 = vunpack.c.h.b16 %v14
    %v26 = vunpack.c.l.b16 %v15
    %v27 = vunpack.c.h.b16 %v15
    %v28 = vunpack.c.l.b16 %v16
    %v29 = vunpack.c.h.b16 %v16
    %v30 = vunpack.c.l.b16 %v17
    %v31 = vunpack.c.h.b16 %v17
    %v32 = vunpack.c.l.b16 %v18
    %v33 = vunpack.c.h.b16 %v18
    %v34 = vpack.c.b16 %v26, %v24
    %v35 = vpack.c.b16 %v27, %v25
    %v36 = vpack.c.b16 %v30, %v28
    %v37 = vpack.c.b16 %v31, %v29
    %v38 = vpack.c.b16 %v32, %v32
    %v39 = vpack.c.b16 %v33, %v33
    %vm44 = vcmask 293888
    %v46 = vsel %vm44, %v13, 0
    %vm48 = vcmask 1041408
    %v50 = vsel %vm48, %v38, 0
    %v53 = vsel %vm48, %v39, 0
    %55 = vmatpush.bf16.msra.mxu0 0
    %56 = vmatpush.bf16.msra.mxu0 0
    %57 = vmatpush.bf16.msra.mxu0 0
    %58 = vmatpush.bf16.msra.mxu0 0
    %59 = vmatpush.bf16.msra.mxu0 0
    %60 = vmatpush.bf16.msra.mxu0 %v50
    %61 = vmatpush.bf16.msra.mxu0 %v36
    %62 = vmatpush.bf16.msra.mxu0 %v34
    %63 = vmatmul.bf16.gmra.mxu0 %v46
    %v64 = vpop.f32.mrf.mxu0
    %v65 = vadd.f32 0.0, %v64
    %v66 = vpop.f32.mrf.mxu0
    %67 = vdwg.mxu0
    %68 = vmatpush.bf16.msra.mxu0 0
    %69 = vmatpush.bf16.msra.mxu0 0
    %70 = vmatpush.bf16.msra.mxu0 0
    %71 = vmatpush.bf16.msra.mxu0 0
    %72 = vmatpush.bf16.msra.mxu0 0
    %73 = vmatpush.bf16.msra.mxu0 %v53
    %74 = vmatpush.bf16.msra.mxu0 %v37
    %75 = vmatpush.bf16.msra.mxu0 %v35
    %76 = vmatmul.bf16.gmra.mxu0 %v46
    %v77 = vpop.f32.mrf.mxu0
    %v78 = vadd.f32 0.0, %v77
    %v79 = vpop.f32.mrf.mxu0
    %80 = vdwg.mxu0
    %v81 = vadd.f32 %v65, %v78
    %82 = vadd.xlane.f32.xlu0 %v81
    %v83 = vpop.xlane.xlu0 %82
    %v84 = vmul.f32 %v65, %v65
    %v85 = vmul.f32 %v78, %v78
    %v86 = vadd.f32 %v84, %v85
    %87 = vadd.xlane.f32.xlu0 %v86
    %v88 = vpop.xlane.xlu0 %87
    %v89 = vmul.f32 %v83, 0.00390625
    %v90 = vmul.f32 %v88, 0.00390625
    %v91 = vmul.f32 %v89, %v89
    %v92 = vsub.f32 %v90, %v91
    %v93 = vmax.f32 %v92, 0.0
    %v94 = vadd.f32 %v93, 1e-05
    %v95 = vrsqrt.pop %v94
    %v96 = vmul.f32 %v95, %v94
    %v97 = vmul.f32 %v96, %v95
    %v98 = vmul.f32 0.5, %v97
    %v99 = vsub.f32 1.5, %v98
    %v100 = vmul.f32 %v95, %v99
    %vm101 = vweird.f32 %v94
    %vm102 = vweird.f32 %v95
    %vm103 = vmor %vm101, %vm102
    %v104 = vsel %vm103, %v95, %v100
    %v105 = vmul.f32 %v65, %v104
    %v106 = vmul.f32 %v78, %v104
    %v107 = vmul.f32 %v89, %v104
    %v108 = vsub.f32 %v105, %v107
    %v109 = vsub.f32 %v106, %v107
    %v110 = vmax.f32 %v108, 0.0
    %v111 = vmax.f32 %v109, 0.0
    %112 = vst [vmem:[#allocation2] sm:$0xff] %v110
    %113 = vst [vmem:[#allocation2 + $0x8] sm:$0xff] %v111
    %s114 = scalar_lea.vmem %s1, 40
    %v115 = vld [vmem:[%s114] sm:$0xff]
    %v116 = vld [vmem:[%s114 + $0x8] sm:$0xff]
    %v117 = vld [vmem:[%s114 + $0x10] sm:$0xff]
    %v118 = vld [vmem:[%s114 + $0x18] sm:$0xff]
    %v119 = vld [vmem:[%s114 + $0x20] sm:$0x33]
    %v125 = vunpack.c.l.b16 %v115
    %v126 = vunpack.c.h.b16 %v115
    %v127 = vunpack.c.l.b16 %v116
    %v128 = vunpack.c.h.b16 %v116
    %v129 = vunpack.c.l.b16 %v117
    %v130 = vunpack.c.h.b16 %v117
    %v131 = vunpack.c.l.b16 %v118
    %v132 = vunpack.c.h.b16 %v118
    %v133 = vunpack.c.l.b16 %v119
    %v134 = vunpack.c.h.b16 %v119
    %v135 = vpack.c.b16 %v127, %v125
    %v136 = vpack.c.b16 %v128, %v126
    %v137 = vpack.c.b16 %v131, %v129
    %v138 = vpack.c.b16 %v132, %v130
    %v139 = vpack.c.b16 %v133, %v133
    %v140 = vpack.c.b16 %v134, %v134
    %v146 = vsel %vm48, %v139, 0
    %v149 = vsel %vm48, %v140, 0
    %151 = vmatpush.bf16.msra.mxu0 0
    %152 = vmatpush.bf16.msra.mxu0 0
    %153 = vmatpush.bf16.msra.mxu0 0
    %154 = vmatpush.bf16.msra.mxu0 0
    %155 = vmatpush.bf16.msra.mxu0 0
    %156 = vmatpush.bf16.msra.mxu0 %v146
    %157 = vmatpush.bf16.msra.mxu0 %v137
    %158 = vmatpush.bf16.msra.mxu0 %v135
    %159 = vmatmul.bf16.gmra.mxu0 %v46
    %v160 = vpop.f32.mrf.mxu0
    %v161 = vadd.f32 0.0, %v160
    %v162 = vpop.f32.mrf.mxu0
    %163 = vdwg.mxu0
    %164 = vmatpush.bf16.msra.mxu0 0
    %165 = vmatpush.bf16.msra.mxu0 0
    %166 = vmatpush.bf16.msra.mxu0 0
    %167 = vmatpush.bf16.msra.mxu0 0
    %168 = vmatpush.bf16.msra.mxu0 0
    %169 = vmatpush.bf16.msra.mxu0 %v149
    %170 = vmatpush.bf16.msra.mxu0 %v138
    %171 = vmatpush.bf16.msra.mxu0 %v136
    %172 = vmatmul.bf16.gmra.mxu0 %v46
    %v173 = vpop.f32.mrf.mxu0
    %v174 = vadd.f32 0.0, %v173
    %v175 = vpop.f32.mrf.mxu0
    %176 = vdwg.mxu0
    %v177 = vadd.f32 %v161, %v174
    %178 = vadd.xlane.f32.xlu0 %v177
    %v179 = vpop.xlane.xlu0 %178
    %v180 = vmul.f32 %v161, %v161
    %v181 = vmul.f32 %v174, %v174
    %v182 = vadd.f32 %v180, %v181
    %183 = vadd.xlane.f32.xlu0 %v182
    %v184 = vpop.xlane.xlu0 %183
    %v185 = vmul.f32 %v179, 0.00390625
    %v186 = vmul.f32 %v184, 0.00390625
    %v187 = vmul.f32 %v185, %v185
    %v188 = vsub.f32 %v186, %v187
    %v189 = vmax.f32 %v188, 0.0
    %v190 = vadd.f32 %v189, 1e-05
    %v191 = vrsqrt.pop %v190
    %v192 = vmul.f32 %v191, %v190
    %v193 = vmul.f32 %v192, %v191
    %v194 = vmul.f32 0.5, %v193
    %v195 = vsub.f32 1.5, %v194
    %v196 = vmul.f32 %v191, %v195
    %vm197 = vweird.f32 %v190
    %vm198 = vweird.f32 %v191
    %vm199 = vmor %vm197, %vm198
    %v200 = vsel %vm199, %v191, %v196
    %v201 = vmul.f32 %v161, %v200
    %v202 = vmul.f32 %v174, %v200
    %v203 = vmul.f32 %v185, %v200
    %v204 = vsub.f32 %v201, %v203
    %v205 = vsub.f32 %v202, %v203
    %v206 = vmax.f32 %v204, 0.0
    %v207 = vmax.f32 %v205, 0.0
    %s208 = scalar_lea.vmem [#allocation2], 16
    %209 = vst [vmem:[%s208] sm:$0xff] %v206
    %210 = vst [vmem:[%s208 + $0x8] sm:$0xff] %v207
    // Predicated region
    $region10: #{tpu_custom_call.1} parent=1 // pred_check
      _
    $region11: #{tpu_custom_call.1} parent=1 // pred_check_branch
      %212 = sbr.rel (0) target = $region13
    $region12: #{tpu_custom_call.1} parent=1 // pred_region
      %214 = vsyncadd [#allocation3], 0
      %s215 = sshll.u32 [#allocation2], 4
      %s216 = int_to_ptr.vmem [resolvable:$true] %s215
      %s217 = sshll.u32 %s2, 4
      %s218 = int_to_ptr.hbm [resolvable:$true] %s217
      %223 = dma.vmem_to_hbm [thread:$0]  %s216, 512, %s218, [#allocation3], 256, 256, 16
    $region13: #{tpu_custom_call.1} parent=1 // pred_fallthru
      _
    // Predicated region
    $region14: #{tpu_custom_call.1} parent=1 // pred_check
      _
    $region15: #{tpu_custom_call.1} parent=1 // pred_check_branch
      %225 = sbr.rel (0) target = $region17
    $region16: #{tpu_custom_call.1} parent=1 // pred_region
      %227 = dma.done [#allocation3], 512
    $region17: #{tpu_custom_call.1} parent=1 // pred_fallthru
      _
    %228 = vsyncpa [#allocation3], 1

</llo_original>
